<compile_context>
chip_gen: v6e
topology: v6e:2x2x1
jax: 0.10.0
libtpu: 0.0.40
codegen_flags: <defaults>
</compile_context>

<pallas_src>
import functools

import jax
import jax.numpy as jnp
from jax.experimental import pallas as pl
from jax.experimental.pallas import tpu as pltpu

F_PAD = 128                      # lane-padded feature width used through the net
TM_CAP = 256                     # row-tile cap (fine on v5e/v6e/v7x)
TK_CAP = 512                     # neighbor (reduction) tile cap
VMEM_LIMIT = 32 * 1024 * 1024    # explicit scoped-VMEM budget (safe on v5e/v6e/v7x)
FUSED_MAX_NODES = 1024           # bf16 A (<= 2 MiB) stays fully VMEM-resident below this


def _round_up(x, m):
    return ((x + m - 1) // m) * m


def _pick_tile(cap, total):
    """Largest multiple of 128 <= cap that divides total (total is a multiple of 128)."""
    t = min(cap, total)
    while total % t:
        t -= 128
    return t


def _pad2d(x, rows, cols):
    return jnp.pad(x, ((0, rows - x.shape[0]), (0, cols - x.shape[1])))


# ---------------------------------------------------------------------------
# Fused 3-layer kernel: whole (padded) problem resident in VMEM, A loaded once.
# ---------------------------------------------------------------------------
def _gcn_fused_kernel(a_ref, x_ref, w_ref, b_ref, o_ref, *, num_layers):
    a = a_ref[...]                       # (n_pad, n_pad) bf16, resident
    h = x_ref[...]                       # (n_pad, F_PAD) bf16
    for l in range(num_layers):
        ah = jnp.dot(a, h, preferred_element_type=jnp.float32)
        z = jnp.dot(ah.astype(jnp.bfloat16), w_ref[l],
                    preferred_element_type=jnp.float32)
        z = z + b_ref[l]
        if l != num_layers - 1:
            z = jnp.maximum(z, 0.0)
            h = z.astype(jnp.bfloat16)
        else:
            h = z
    o_ref[...] = h.astype(o_ref.dtype)


def _gcn_fused(a_pad, x_pad, w_pads, b_pads):
    n_pad = a_pad.shape[0]
    num_layers = len(w_pads)
    w_stack = jnp.stack(w_pads)          # (L, 128, 128) bf16
    b_stack = jnp.stack(b_pads)          # (L, 1, 128)   f32

    flops = num_layers * (2 * n_pad * n_pad * F_PAD + 2 * n_pad * F_PAD * F_PAD)
    bytes_accessed = int(a_pad.size * 2 + x_pad.size * 2 + n_pad * F_PAD * 4
                         + w_stack.size * 2 + b_stack.size * 4)

    vmem = pl.BlockSpec(memory_space=pltpu.MemorySpace.VMEM)
    return pl.pallas_call(
        functools.partial(_gcn_fused_kernel, num_layers=num_layers),
        out_shape=jax.ShapeDtypeStruct((n_pad, F_PAD), jnp.float32),
        in_specs=[vmem, vmem, vmem, vmem],
        out_specs=vmem,
        compiler_params=pltpu.CompilerParams(vmem_limit_bytes=VMEM_LIMIT),
        cost_estimate=pl.CostEstimate(flops=flops, transcendentals=0,
                                      bytes_accessed=bytes_accessed),
    )(a_pad, x_pad, w_stack, b_stack)


# ---------------------------------------------------------------------------
# Tiled per-layer kernel: grid = (row tiles, neighbor/reduction tiles).
# Accumulates A_tile @ H_tile in f32 scratch; applies W, bias, ReLU only in the
# reduction-finalize branch.
# ---------------------------------------------------------------------------
def _gcn_layer_tiled_kernel(a_ref, h_ref, w_ref, b_ref, o_ref, acc_ref, *,
                            apply_relu):
    k = pl.program_id(1)

    @pl.when(k == 0)
    def _():
        acc_ref[...] = jnp.zeros_like(acc_ref)

    acc_ref[...] += jnp.dot(a_ref[...], h_ref[...],
                            preferred_element_type=jnp.float32)

    @pl.when(k == pl.num_programs(1) - 1)
    def _():
        z = jnp.dot(acc_ref[...].astype(jnp.bfloat16), w_ref[...],
                    preferred_element_type=jnp.float32)
        z = z + b_ref[...]
        if apply_relu:
            z = jnp.maximum(z, 0.0)
        o_ref[...] = z.astype(o_ref.dtype)


def _gcn_layer_tiled(a_pad, h_pad, w_pad, b_pad, *, apply_relu, out_dtype):
    n_pad = a_pad.shape[0]
    tm = _pick_tile(TM_CAP, n_pad)
    tk = _pick_tile(TK_CAP, n_pad)
    grid = (n_pad // tm, n_pad // tk)

    flops = 2 * n_pad * n_pad * F_PAD + 2 * n_pad * F_PAD * F_PAD
    bytes_accessed = int(n_pad * n_pad * 2 + n_pad * F_PAD * 2
                         + n_pad * F_PAD * jnp.dtype(out_dtype).itemsize
                         + F_PAD * F_PAD * 2 + F_PAD * 4)

    grid_spec = pltpu.PrefetchScalarGridSpec(
        num_scalar_prefetch=0,
        grid=grid,
        in_specs=[
            pl.BlockSpec((tm, tk), lambda i, k: (i, k)),        # A row/neighbor tile
            pl.BlockSpec((tk, F_PAD), lambda i, k: (k, 0)),     # H neighbor tile
            pl.BlockSpec((F_PAD, F_PAD), lambda i, k: (0, 0)),  # W (resident)
            pl.BlockSpec((1, F_PAD), lambda i, k: (0, 0)),      # bias (resident)
        ],
        out_specs=pl.BlockSpec((tm, F_PAD), lambda i, k: (i, 0)),
        scratch_shapes=[pltpu.VMEM((tm, F_PAD), jnp.float32)],
    )

    return pl.pallas_call(
        functools.partial(_gcn_layer_tiled_kernel, apply_relu=apply_relu),
        out_shape=jax.ShapeDtypeStruct((n_pad, F_PAD), out_dtype),
        grid_spec=grid_spec,
        compiler_params=pltpu.CompilerParams(
            dimension_semantics=("parallel", "arbitrary"),
            vmem_limit_bytes=VMEM_LIMIT),
        cost_estimate=pl.CostEstimate(flops=flops, transcendentals=0,
                                      bytes_accessed=bytes_accessed),
    )(a_pad, h_pad, w_pad, b_pad)


# ---------------------------------------------------------------------------
# Forward pass (matches DGL GraphConv norm='both': H_out = act(A_norm @ H @ W + b))
# ---------------------------------------------------------------------------
def _prep_params(params):
    w_pads, b_pads = [], []
    for w, b in params:
        w_pads.append(_pad2d(w.astype(jnp.float32), F_PAD, F_PAD).astype(jnp.bfloat16))
        b_pads.append(_pad2d(b.reshape(1, -1).astype(jnp.float32), 1, F_PAD))
    return w_pads, b_pads


def gcn_forward(a_norm, x, params, *, use_fused=None):
    n = a_norm.shape[0]
    f_out = params[-1][0].shape[1]
    n_pad = _round_up(max(n, 1), 128)
    if use_fused is None:
        use_fused = n_pad <= FUSED_MAX_NODES

    a_pad = _pad2d(a_norm.astype(jnp.float32), n_pad, n_pad).astype(jnp.bfloat16)
    h_pad = _pad2d(x.astype(jnp.float32), n_pad, F_PAD).astype(jnp.bfloat16)
    w_pads, b_pads = _prep_params(params)

    if use_fused:
        out = _gcn_fused(a_pad, h_pad, w_pads, b_pads)
    else:
        num_layers = len(params)
        h = h_pad
        for i, (w_p, b_p) in enumerate(zip(w_pads, b_pads)):
            last = (i == num_layers - 1)
            # Dropout between layers is identity in eval mode.
            h = _gcn_layer_tiled(a_pad, h, w_p, b_p,
                                 apply_relu=not last,
                                 out_dtype=jnp.float32 if last else jnp.bfloat16)
        out = h
    return out[:n, :f_out]


# ---------------------------------------------------------------------------
# Example-input construction (deterministic)
# ---------------------------------------------------------------------------
def build_normalized_adjacency(key, n_nodes, p_edge=0.3):
    """Dense symmetric graph with self-loops; DGL 'both' normalization."""
    m = jax.random.bernoulli(key, p_edge, (n_nodes, n_nodes)).astype(jnp.float32)
    a = jnp.maximum(m, m.T)                        # symmetrize
    a = jnp.maximum(a, jnp.eye(n_nodes))           # self-loops (no 0-degree nodes)
    deg = a.sum(axis=1)
    d_inv_sqrt = 1.0 / jnp.sqrt(deg)
    return d_inv_sqrt[:, None] * a * d_inv_sqrt[None, :]


def xavier_uniform(key, fan_in, fan_out):
    limit = jnp.sqrt(6.0 / (fan_in + fan_out))
    return jax.random.uniform(key, (fan_in, fan_out), jnp.float32, -limit, limit)


if __name__ == "__main__":
    # Small shapes consistent with the module's __init__.
    n_nodes = 16
    in_size, hid_size1, hid_size2, out_size = 16, 32, 32, 8

    key = jax.random.PRNGKey(0)
    k_graph, k_x, k_w0, k_w1, k_w2 = jax.random.split(key, 5)

    a_norm = build_normalized_adjacency(k_graph, n_nodes)
    x = jax.random.normal(k_x, (n_nodes, in_size), jnp.float32)

    # DGL GraphConv: weight (in, out) Xavier-uniform, bias zeros.
    params = [
        (xavier_uniform(k_w0, in_size, hid_size1), jnp.zeros((hid_size1,), jnp.float32)),
        (xavier_uniform(k_w1, hid_size1, hid_size2), jnp.zeros((hid_size2,), jnp.float32)),
        (xavier_uniform(k_w2, hid_size2, out_size), jnp.zeros((out_size,), jnp.float32)),
    ]

    # 1) Small graph -> fused single-kernel path (A resident in VMEM, one launch).
    out = gcn_forward(a_norm, x, params)
    jax.block_until_ready(out)
    assert out.shape == (n_nodes, out_size)

    # 2) Larger graph -> exercise the tiled grid path (row/neighbor tiling + k-reduction).
    n_big = 1024
    kb_graph, kb_x = jax.random.split(jax.random.PRNGKey(1), 2)
    a_big = build_normalized_adjacency(kb_graph, n_big, p_edge=0.01)
    x_big = jax.random.normal(kb_x, (n_big, in_size), jnp.float32)
    out_big = gcn_forward(a_big, x_big, params, use_fused=False)
    jax.block_until_ready(out_big)
    assert out_big.shape == (n_big, out_size)

    print("KERNEL_OK")
</pallas_src>

<mosaic_0001>
module attributes {stable_mosaic.version = 11 : i64} {
  func.func @_gcn_fused_kernel(%arg0: memref<128x128xbf16, #tpu.memory_space<vmem>>, %arg1: memref<128x128xbf16, #tpu.memory_space<vmem>>, %arg2: memref<3x128x128xbf16, #tpu.memory_space<vmem>>, %arg3: memref<3x1x128xf32, #tpu.memory_space<vmem>>, %arg4: memref<128x128xf32, #tpu.memory_space<vmem>>) attributes {dimension_semantics = [], scalar_prefetch = 0 : i64, scratch_operands = 0 : i64, tpu.core_type = #tpu.core_type<tc>} {
    %c0 = arith.constant 0 : index
    %c0_0 = arith.constant 0 : index
    %0 = vector.load %arg0[%c0, %c0_0] : memref<128x128xbf16, #tpu.memory_space<vmem>>, vector<128x128xbf16>
    %c0_1 = arith.constant 0 : index
    %c0_2 = arith.constant 0 : index
    %1 = vector.load %arg1[%c0_1, %c0_2] : memref<128x128xbf16, #tpu.memory_space<vmem>>, vector<128x128xbf16>
    %cst = arith.constant dense<0.000000e+00> : vector<128x128xf32>
    %2 = tpu.matmul %0, %1, %cst {dimension_numbers = #tpu.dot_dimension_numbers<[1], [0], [0], [1], [0, 0, 1, 1], [], []>} : vector<128x128xbf16>, vector<128x128xbf16>, vector<128x128xf32> -> vector<128x128xf32>
    %3 = arith.truncf %2 : vector<128x128xf32> to vector<128x128xbf16>
    %c0_3 = arith.constant 0 : index
    %c0_4 = arith.constant 0 : index
    %c0_5 = arith.constant 0 : index
    %4 = vector.load %arg2[%c0_3, %c0_4, %c0_5] : memref<3x128x128xbf16, #tpu.memory_space<vmem>>, vector<1x128x128xbf16>
    %5 = vector.shape_cast %4 : vector<1x128x128xbf16> to vector<128x128xbf16>
    %cst_6 = arith.constant dense<0.000000e+00> : vector<128x128xf32>
    %6 = tpu.matmul %3, %5, %cst_6 {dimension_numbers = #tpu.dot_dimension_numbers<[1], [0], [0], [1], [0, 0, 1, 1], [], []>} : vector<128x128xbf16>, vector<128x128xbf16>, vector<128x128xf32> -> vector<128x128xf32>
    %c0_7 = arith.constant 0 : index
    %c0_8 = arith.constant 0 : index
    %c0_9 = arith.constant 0 : index
    %7 = vector.load %arg3[%c0_7, %c0_8, %c0_9] : memref<3x1x128xf32, #tpu.memory_space<vmem>>, vector<1x1x128xf32>
    %8 = vector.shape_cast %7 : vector<1x1x128xf32> to vector<1x128xf32>
    %9 = vector.broadcast %8 : vector<1x128xf32> to vector<128x128xf32>
    %10 = arith.addf %6, %9 : vector<128x128xf32>
    %cst_10 = arith.constant 0.000000e+00 : f32
    %11 = vector.broadcast %cst_10 : f32 to vector<128x128xf32>
    %12 = arith.maximumf %10, %11 : vector<128x128xf32>
    %13 = arith.truncf %12 : vector<128x128xf32> to vector<128x128xbf16>
    %cst_11 = arith.constant dense<0.000000e+00> : vector<128x128xf32>
    %14 = tpu.matmul %0, %13, %cst_11 {dimension_numbers = #tpu.dot_dimension_numbers<[1], [0], [0], [1], [0, 0, 1, 1], [], []>} : vector<128x128xbf16>, vector<128x128xbf16>, vector<128x128xf32> -> vector<128x128xf32>
    %15 = arith.truncf %14 : vector<128x128xf32> to vector<128x128xbf16>
    %c1 = arith.constant 1 : index
    %c0_12 = arith.constant 0 : index
    %c0_13 = arith.constant 0 : index
    %16 = vector.load %arg2[%c1, %c0_12, %c0_13] : memref<3x128x128xbf16, #tpu.memory_space<vmem>>, vector<1x128x128xbf16>
    %17 = vector.shape_cast %16 : vector<1x128x128xbf16> to vector<128x128xbf16>
    %cst_14 = arith.constant dense<0.000000e+00> : vector<128x128xf32>
    %18 = tpu.matmul %15, %17, %cst_14 {dimension_numbers = #tpu.dot_dimension_numbers<[1], [0], [0], [1], [0, 0, 1, 1], [], []>} : vector<128x128xbf16>, vector<128x128xbf16>, vector<128x128xf32> -> vector<128x128xf32>
    %c1_15 = arith.constant 1 : index
    %c0_16 = arith.constant 0 : index
    %c0_17 = arith.constant 0 : index
    %19 = vector.load %arg3[%c1_15, %c0_16, %c0_17] : memref<3x1x128xf32, #tpu.memory_space<vmem>>, vector<1x1x128xf32>
    %20 = vector.shape_cast %19 : vector<1x1x128xf32> to vector<1x128xf32>
    %21 = vector.broadcast %20 : vector<1x128xf32> to vector<128x128xf32>
    %22 = arith.addf %18, %21 : vector<128x128xf32>
    %cst_18 = arith.constant 0.000000e+00 : f32
    %23 = vector.broadcast %cst_18 : f32 to vector<128x128xf32>
    %24 = arith.maximumf %22, %23 : vector<128x128xf32>
    %25 = arith.truncf %24 : vector<128x128xf32> to vector<128x128xbf16>
    %cst_19 = arith.constant dense<0.000000e+00> : vector<128x128xf32>
    %26 = tpu.matmul %0, %25, %cst_19 {dimension_numbers = #tpu.dot_dimension_numbers<[1], [0], [0], [1], [0, 0, 1, 1], [], []>} : vector<128x128xbf16>, vector<128x128xbf16>, vector<128x128xf32> -> vector<128x128xf32>
    %27 = arith.truncf %26 : vector<128x128xf32> to vector<128x128xbf16>
    %c2 = arith.constant 2 : index
    %c0_20 = arith.constant 0 : index
    %c0_21 = arith.constant 0 : index
    %28 = vector.load %arg2[%c2, %c0_20, %c0_21] : memref<3x128x128xbf16, #tpu.memory_space<vmem>>, vector<1x128x128xbf16>
    %29 = vector.shape_cast %28 : vector<1x128x128xbf16> to vector<128x128xbf16>
    %cst_22 = arith.constant dense<0.000000e+00> : vector<128x128xf32>
    %30 = tpu.matmul %27, %29, %cst_22 {dimension_numbers = #tpu.dot_dimension_numbers<[1], [0], [0], [1], [0, 0, 1, 1], [], []>} : vector<128x128xbf16>, vector<128x128xbf16>, vector<128x128xf32> -> vector<128x128xf32>
    %c2_23 = arith.constant 2 : index
    %c0_24 = arith.constant 0 : index
    %c0_25 = arith.constant 0 : index
    %31 = vector.load %arg3[%c2_23, %c0_24, %c0_25] : memref<3x1x128xf32, #tpu.memory_space<vmem>>, vector<1x1x128xf32>
    %32 = vector.shape_cast %31 : vector<1x1x128xf32> to vector<1x128xf32>
    %33 = vector.broadcast %32 : vector<1x128xf32> to vector<128x128xf32>
    %34 = arith.addf %30, %33 : vector<128x128xf32>
    %c0_26 = arith.constant 0 : index
    %c0_27 = arith.constant 0 : index
    %35 = vector.load %arg4[%c0_26, %c0_27] : memref<128x128xf32, #tpu.memory_space<vmem>>, vector<128x128xf32>
    tpu.vector_store %arg4[%c0_26, %c0_27], %34 {strides = array<i32>} : memref<128x128xf32, #tpu.memory_space<vmem>>, vector<128x128xf32>,
    return
  }
}

</mosaic_0001>

<llo_original>
// kernel: tpu_custom_call.1
$region0: #{tpu_custom_call.1}
  #allocation0 [shape = 'u32[]', space=smem, size = 0x4, offset = 0x4, fixed_abs, tag = 'smem constant byte address 0x4 - core index']
  #allocation1 [shape = 'u32[144,128]{1,0:T(1,128)}', space=vmem, size = 0x12000, scoped, tag = 'internal scratch']
  %s0 = inlined_call_operand.hbm [shape: bf16[128,128], index: 0, kind: input, shape index: {}]
  %s1 = inlined_call_operand.hbm [shape: bf16[128,128], index: 1, kind: input, shape index: {}]
  %s2 = inlined_call_operand.hbm [shape: bf16[3,128,128], index: 2, kind: input, shape index: {}]
  %s3 = inlined_call_operand.vmem [shape: f32[3,1,128], index: 3, kind: input, shape index: {}]
  %s4 = inlined_call_operand.hbm [shape: f32[128,128], index: 4, kind: output, shape index: {}]
  %s5 = sld [smem:[#allocation0]]
  $region38: #{tpu_custom_call.1} parent=0
    _
  %s7 = ssub.s32 1, %s5
  %s8 = scalar_select 0, %s7, %s5
  $region1: #{tpu_custom_call.1} parent=0
    #allocation2 [shape = 'u8[32768]{0}', space=vmem, size = 0x8000, scoped, tag = 'input window, operand 0, single buffered']
    #allocation3 [shape = 's32[1]{0}', space=sflag, size = 0x4, scoped, tag = 'scoped memory for tpu_custom_call.1']
    #allocation4 [shape = 's32[1]{0}', space=sflag, size = 0x4, scoped, tag = 'scoped memory for tpu_custom_call.1']
    #allocation5 [shape = 'u8[32768]{0}', space=vmem, size = 0x8000, scoped, tag = 'input window, operand 1, single buffered']
    #allocation6 [shape = 's32[1]{0}', space=sflag, size = 0x4, scoped, tag = 'scoped memory for tpu_custom_call.1']
    #allocation7 [shape = 'u8[98304]{0}', space=vmem, size = 0x18000, scoped, tag = 'input window, operand 2, single buffered']
    #allocation8 [shape = 'u8[65536]{0}', space=vmem, size = 0x10000, scoped, tag = 'output window, operand 0, single buffered']
    %9 = vsyncpa [#allocation3], 0
    %10 = vsyncpa [#allocation6], 0
    %11 = vsyncpa [#allocation4], 0
    // Predicated region
    $region2: #{tpu_custom_call.1} parent=1 // pred_check
      _
    $region3: #{tpu_custom_call.1} parent=1 // pred_check_branch
      %13 = sbr.rel (0) target = $region5
    $region4: #{tpu_custom_call.1} parent=1 // pred_region
      %s15 = ssub.s32 1024, 1024
      %16 = vsyncadd [#allocation3], %s15
      %s17 = sshll.u32 [#allocation2], 4
      %s18 = int_to_ptr.vmem [resolvable:$true] %s17
      %23 = dma.hbm_to_vmem [thread:$0]  %s0, 1024, %s18, [#allocation3], 64, 64, 4
    $region5: #{tpu_custom_call.1} parent=1 // pred_fallthru
      _
    // Predicated region
    $region6: #{tpu_custom_call.1} parent=1 // pred_check
      _
    $region7: #{tpu_custom_call.1} parent=1 // pred_check_branch
      %25 = sbr.rel (0) target = $region9
    $region8: #{tpu_custom_call.1} parent=1 // pred_region
      %s27 = ssub.s32 1024, 1024
      %28 = vsyncadd [#allocation6], %s27
      %s29 = sshll.u32 [#allocation5], 4
      %s30 = int_to_ptr.vmem [resolvable:$true] %s29
      %35 = dma.hbm_to_vmem [thread:$0]  %s1, 1024, %s30, [#allocation6], 64, 64, 4
    $region9: #{tpu_custom_call.1} parent=1 // pred_fallthru
      _
    // Predicated region
    $region10: #{tpu_custom_call.1} parent=1 // pred_check
      _
    $region11: #{tpu_custom_call.1} parent=1 // pred_check_branch
      %37 = sbr.rel (0) target = $region13
    $region12: #{tpu_custom_call.1} parent=1 // pred_region
      %s39 = ssub.s32 3072, 3072
      %40 = vsyncadd [#allocation6], %s39
      %s41 = sshll.u32 [#allocation7], 4
      %s42 = int_to_ptr.vmem [resolvable:$true] %s41
      %47 = dma.hbm_to_vmem [thread:$0]  %s2, 3072, %s42, [#allocation6], 64, 64, 4
    $region13: #{tpu_custom_call.1} parent=1 // pred_fallthru
      _
    // Predicated region
    $region14: #{tpu_custom_call.1} parent=1 // pred_check
      _
    $region15: #{tpu_custom_call.1} parent=1 // pred_check_branch
      %49 = sbr.rel (0) target = $region17
    $region16: #{tpu_custom_call.1} parent=1 // pred_region
      _
    $region17: #{tpu_custom_call.1} parent=1 // pred_fallthru
      _
    // Predicated region
    $region18: #{tpu_custom_call.1} parent=1 // pred_check
      _
    $region19: #{tpu_custom_call.1} parent=1 // pred_check_branch
      %51 = sbr.rel (0) target = $region21
    $region20: #{tpu_custom_call.1} parent=1 // pred_region
      %52 = dma.done [#allocation3], 1024
    $region21: #{tpu_custom_call.1} parent=1 // pred_fallthru
      _
    // Predicated region
    $region22: #{tpu_custom_call.1} parent=1 // pred_check
      _
    $region23: #{tpu_custom_call.1} parent=1 // pred_check_branch
      %54 = sbr.rel (0) target = $region25
    $region24: #{tpu_custom_call.1} parent=1 // pred_region
      %55 = dma.done [#allocation6], 1024
    $region25: #{tpu_custom_call.1} parent=1 // pred_fallthru
      _
    // Predicated region
    $region26: #{tpu_custom_call.1} parent=1 // pred_check
      _
    $region27: #{tpu_custom_call.1} parent=1 // pred_check_branch
      %57 = sbr.rel (0) target = $region29
    $region28: #{tpu_custom_call.1} parent=1 // pred_region
      %58 = dma.done [#allocation6], 3072
    $region29: #{tpu_custom_call.1} parent=1 // pred_fallthru
      _
    %v60 = vld [vmem:[#allocation2] sm:$0xf]
    %v61 = vld [vmem:[#allocation2 + $0x4] sm:$0xf]
    %v62 = vld [vmem:[#allocation2 + $0x8] sm:$0xf]
    %v63 = vld [vmem:[#allocation2 + $0xc] sm:$0xf]
    %v64 = vld [vmem:[#allocation2 + $0x10] sm:$0xf]
    %v65 = vld [vmem:[#allocation2 + $0x14] sm:$0xf]
    %v66 = vld [vmem:[#allocation2 + $0x18] sm:$0xf]
    %v67 = vld [vmem:[#allocation2 + $0x1c] sm:$0xf]
    %v68 = vld [vmem:[#allocation2 + $0x20] sm:$0xf]
    %v69 = vld [vmem:[#allocation2 + $0x24] sm:$0xf]
    %v70 = vld [vmem:[#allocation2 + $0x28] sm:$0xf]
    %v71 = vld [vmem:[#allocation2 + $0x2c] sm:$0xf]
    %v72 = vld [vmem:[#allocation2 + $0x30] sm:$0xf]
    %v73 = vld [vmem:[#allocation2 + $0x34] sm:$0xf]
    %v74 = vld [vmem:[#allocation2 + $0x38] sm:$0xf]
    %v75 = vld [vmem:[#allocation2 + $0x3c] sm:$0xf]
    %v76 = vld [vmem:[#allocation5] sm:$0xf]
    %v77 = vld [vmem:[#allocation5 + $0x4] sm:$0xf]
    %v78 = vld [vmem:[#allocation5 + $0x8] sm:$0xf]
    %v79 = vld [vmem:[#allocation5 + $0xc] sm:$0xf]
    %v80 = vld [vmem:[#allocation5 + $0x10] sm:$0xf]
    %v81 = vld [vmem:[#allocation5 + $0x14] sm:$0xf]
    %v82 = vld [vmem:[#allocation5 + $0x18] sm:$0xf]
    %v83 = vld [vmem:[#allocation5 + $0x1c] sm:$0xf]
    %v84 = vld [vmem:[#allocation5 + $0x20] sm:$0xf]
    %v85 = vld [vmem:[#allocation5 + $0x24] sm:$0xf]
    %v86 = vld [vmem:[#allocation5 + $0x28] sm:$0xf]
    %v87 = vld [vmem:[#allocation5 + $0x2c] sm:$0xf]
    %v88 = vld [vmem:[#allocation5 + $0x30] sm:$0xf]
    %v89 = vld [vmem:[#allocation5 + $0x34] sm:$0xf]
    %v90 = vld [vmem:[#allocation5 + $0x38] sm:$0xf]
    %v91 = vld [vmem:[#allocation5 + $0x3c] sm:$0xf]
    %v108 = vunpack.c.l.b16 %v60
    %v109 = vunpack.c.l.b16 %v61
    %v110 = vunpack.c.l.b16 %v62
    %v111 = vunpack.c.l.b16 %v63
    %v112 = vunpack.c.l.b16 %v64
    %v113 = vunpack.c.l.b16 %v65
    %v114 = vunpack.c.l.b16 %v66
    %v115 = vunpack.c.l.b16 %v67
    %v116 = vunpack.c.l.b16 %v68
    %v117 = vunpack.c.l.b16 %v69
    %v118 = vunpack.c.l.b16 %v70
    %v119 = vunpack.c.l.b16 %v71
    %v120 = vunpack.c.l.b16 %v72
    %v121 = vunpack.c.l.b16 %v73
    %v122 = vunpack.c.l.b16 %v74
    %v123 = vunpack.c.l.b16 %v75
    %v124 = vpack.c.b16 %v109, %v108
    %v125 = vpack.c.b16 %v111, %v110
    %v126 = vpack.c.b16 %v113, %v112
    %v127 = vpack.c.b16 %v115, %v114
    %v128 = vpack.c.b16 %v117, %v116
    %v129 = vpack.c.b16 %v119, %v118
    %v130 = vpack.c.b16 %v121, %v120
    %v131 = vpack.c.b16 %v123, %v122
    %v156 = vunpack.c.l.b16 %v76
    %v157 = vunpack.c.l.b16 %v77
    %v158 = vunpack.c.l.b16 %v78
    %v159 = vunpack.c.l.b16 %v79
    %v160 = vunpack.c.l.b16 %v80
    %v161 = vunpack.c.l.b16 %v81
    %v162 = vunpack.c.l.b16 %v82
    %v163 = vunpack.c.l.b16 %v83
    %v164 = vunpack.c.l.b16 %v84
    %v165 = vunpack.c.l.b16 %v85
    %v166 = vunpack.c.l.b16 %v86
    %v167 = vunpack.c.l.b16 %v87
    %v168 = vunpack.c.l.b16 %v88
    %v169 = vunpack.c.l.b16 %v89
    %v170 = vunpack.c.l.b16 %v90
    %v171 = vunpack.c.l.b16 %v91
    %v172 = vpack.c.b16 %v157, %v156
    %v173 = vpack.c.b16 %v159, %v158
    %v174 = vpack.c.b16 %v161, %v160
    %v175 = vpack.c.b16 %v163, %v162
    %v176 = vpack.c.b16 %v165, %v164
    %v177 = vpack.c.b16 %v167, %v166
    %v178 = vpack.c.b16 %v169, %v168
    %v179 = vpack.c.b16 %v171, %v170
    %188 = vmatprep.subr.bf16.mxu0 0
    %189 = vmatpush1.bf16.msra.mxu0 %v179
    %190 = vmatprep.subr.bf16.mxu0 0
    %191 = vmatpush1.bf16.msra.mxu0 %v178
    %192 = vmatprep.subr.bf16.mxu0 0
    %193 = vmatpush1.bf16.msra.mxu0 %v177
    %194 = vmatprep.subr.bf16.mxu0 0
    %195 = vmatpush1.bf16.msra.mxu0 %v176
    %196 = vmatprep.subr.bf16.mxu0 0
    %197 = vmatpush1.bf16.msra.mxu0 %v175
    %198 = vmatprep.subr.bf16.mxu0 0
    %199 = vmatpush1.bf16.msra.mxu0 %v174
    %200 = vmatprep.subr.bf16.mxu0 0
    %201 = vmatpush1.bf16.msra.mxu0 %v173
    %202 = vmatprep.subr.bf16.mxu0 0
    %203 = vmatpush1.bf16.msra.mxu0 %v172
    %204 = vmatprep.subr.bf16.mxu0 0
    %205 = vmatpush2.bf16.msra.mxu0 0
    %206 = vmatprep.subr.bf16.mxu0 0
    %207 = vmatpush2.bf16.msra.mxu0 0
    %208 = vmatprep.subr.bf16.mxu0 0
    %209 = vmatpush2.bf16.msra.mxu0 0
    %210 = vmatprep.subr.bf16.mxu0 0
    %211 = vmatpush2.bf16.msra.mxu0 0
    %212 = vmatprep.subr.bf16.mxu0 0
    %213 = vmatpush2.bf16.msra.mxu0 0
    %214 = vmatprep.subr.bf16.mxu0 0
    %215 = vmatpush2.bf16.msra.mxu0 0
    %216 = vmatprep.subr.bf16.mxu0 0
    %217 = vmatpush2.bf16.msra.mxu0 0
    %218 = vmatprep.subr.bf16.mxu0 0
    %219 = vmatpush2.bf16.msra.mxu0 0
    %220 = vmatprep.mubr.bf16.mxu0 0
    %221 = vmatmul.mubr.bf16.gmra.mxu0 %v124
    %v222 = vpop.f32.mrf.mxu0
    %v223 = vadd.f32 0.0, %v222
    %v224 = vpop.f32.mrf.mxu0
    %v225 = vpop.f32.mrf.mxu0
    %v226 = vadd.f32 0.0, %v225
    %v227 = vpop.f32.mrf.mxu0
    %228 = vmatprep.mubr.bf16.mxu0 0
    %229 = vmatmul.mubr.bf16.gmra.mxu0 %v125
    %v230 = vpop.f32.mrf.mxu0
    %v231 = vadd.f32 0.0, %v230
    %v232 = vpop.f32.mrf.mxu0
    %v233 = vpop.f32.mrf.mxu0
    %v234 = vadd.f32 0.0, %v233
    %v235 = vpop.f32.mrf.mxu0
    %236 = vmatprep.mubr.bf16.mxu0 0
    %237 = vmatmul.mubr.bf16.gmra.mxu0 %v126
    %v238 = vpop.f32.mrf.mxu0
    %v239 = vadd.f32 0.0, %v238
    %v240 = vpop.f32.mrf.mxu0
    %v241 = vpop.f32.mrf.mxu0
    %v242 = vadd.f32 0.0, %v241
    %v243 = vpop.f32.mrf.mxu0
    %244 = vmatprep.mubr.bf16.mxu0 0
    %245 = vmatmul.mubr.bf16.gmra.mxu0 %v127
    %v246 = vpop.f32.mrf.mxu0
    %v247 = vadd.f32 0.0, %v246
    %v248 = vpop.f32.mrf.mxu0
    %v249 = vpop.f32.mrf.mxu0
    %v250 = vadd.f32 0.0, %v249
    %v251 = vpop.f32.mrf.mxu0
    %252 = vmatprep.mubr.bf16.mxu0 0
    %253 = vmatmul.mubr.bf16.gmra.mxu0 %v128
    %v254 = vpop.f32.mrf.mxu0
    %v255 = vadd.f32 0.0, %v254
    %v256 = vpop.f32.mrf.mxu0
    %v257 = vpop.f32.mrf.mxu0
    %v258 = vadd.f32 0.0, %v257
    %v259 = vpop.f32.mrf.mxu0
    %260 = vmatprep.mubr.bf16.mxu0 0
    %261 = vmatmul.mubr.bf16.gmra.mxu0 %v129
    %v262 = vpop.f32.mrf.mxu0
    %v263 = vadd.f32 0.0, %v262
    %v264 = vpop.f32.mrf.mxu0
    %v265 = vpop.f32.mrf.mxu0
    %v266 = vadd.f32 0.0, %v265
    %v267 = vpop.f32.mrf.mxu0
    %268 = vmatprep.mubr.bf16.mxu0 0
    %269 = vmatmul.mubr.bf16.gmra.mxu0 %v130
    %v270 = vpop.f32.mrf.mxu0
    %v271 = vadd.f32 0.0, %v270
    %v272 = vpop.f32.mrf.mxu0
    %v273 = vpop.f32.mrf.mxu0
    %v274 = vadd.f32 0.0, %v273
    %v275 = vpop.f32.mrf.mxu0
    %276 = vmatprep.mubr.bf16.mxu0 0
    %277 = vmatmul.mubr.bf16.gmra.mxu0 %v131
    %v278 = vpop.f32.mrf.mxu0
    %v279 = vadd.f32 0.0, %v278
    %v280 = vpop.f32.mrf.mxu0
    %v281 = vpop.f32.mrf.mxu0
    %v282 = vadd.f32 0.0, %v281
    %v283 = vpop.f32.mrf.mxu0
    %284 = vdwg.mxu0
    %v285 = vpack.c.bf16 %v226, %v223
    %v286 = vpack.c.bf16 %v234, %v231
    %v287 = vpack.c.bf16 %v242, %v239
    %v288 = vpack.c.bf16 %v250, %v247
    %v289 = vpack.c.bf16 %v258, %v255
    %v290 = vpack.c.bf16 %v266, %v263
    %v291 = vpack.c.bf16 %v274, %v271
    %v292 = vpack.c.bf16 %v282, %v279
    %v293 = vld [vmem:[#allocation7] sm:$0xf]
    %v294 = vld [vmem:[#allocation7 + $0x4] sm:$0xf]
    %v295 = vld [vmem:[#allocation7 + $0x8] sm:$0xf]
    %v296 = vld [vmem:[#allocation7 + $0xc] sm:$0xf]
    %v297 = vld [vmem:[#allocation7 + $0x10] sm:$0xf]
    %v298 = vld [vmem:[#allocation7 + $0x14] sm:$0xf]
    %v299 = vld [vmem:[#allocation7 + $0x18] sm:$0xf]
    %v300 = vld [vmem:[#allocation7 + $0x1c] sm:$0xf]
    %v301 = vld [vmem:[#allocation7 + $0x20] sm:$0xf]
    %v302 = vld [vmem:[#allocation7 + $0x24] sm:$0xf]
    %v303 = vld [vmem:[#allocation7 + $0x28] sm:$0xf]
    %v304 = vld [vmem:[#allocation7 + $0x2c] sm:$0xf]
    %v305 = vld [vmem:[#allocation7 + $0x30] sm:$0xf]
    %v306 = vld [vmem:[#allocation7 + $0x34] sm:$0xf]
    %v307 = vld [vmem:[#allocation7 + $0x38] sm:$0xf]
    %v308 = vld [vmem:[#allocation7 + $0x3c] sm:$0xf]
    %v309 = vld [vmem:[%s3] sm:$0x1]
    %v311 = vlaneseq
    %v312 = vshrl.u32 %v311, 7
    %v313 = vsub.s32 0, %v312
    %v314 = vrot.slane %v309, %v313
    %v332 = vunpack.c.l.b16 %v293
    %v333 = vunpack.c.l.b16 %v294
    %v334 = vunpack.c.l.b16 %v295
    %v335 = vunpack.c.l.b16 %v296
    %v336 = vunpack.c.l.b16 %v297
    %v337 = vunpack.c.l.b16 %v298
    %v338 = vunpack.c.l.b16 %v299
    %v339 = vunpack.c.l.b16 %v300
    %v340 = vunpack.c.l.b16 %v301
    %v341 = vunpack.c.l.b16 %v302
    %v342 = vunpack.c.l.b16 %v303
    %v343 = vunpack.c.l.b16 %v304
    %v344 = vunpack.c.l.b16 %v305
    %v345 = vunpack.c.l.b16 %v306
    %v346 = vunpack.c.l.b16 %v307
    %v347 = vunpack.c.l.b16 %v308
    %v348 = vpack.c.b16 %v333, %v332
    %v349 = vpack.c.b16 %v335, %v334
    %v350 = vpack.c.b16 %v337, %v336
    %v351 = vpack.c.b16 %v339, %v338
    %v352 = vpack.c.b16 %v341, %v340
    %v353 = vpack.c.b16 %v343, %v342
    %v354 = vpack.c.b16 %v345, %v344
    %v355 = vpack.c.b16 %v347, %v346
    %364 = vmatprep.subr.bf16.mxu0 0
    %365 = vmatpush1.bf16.msra.mxu0 %v355
    %366 = vmatprep.subr.bf16.mxu0 0
    %367 = vmatpush1.bf16.msra.mxu0 %v354
    %368 = vmatprep.subr.bf16.mxu0 0
    %369 = vmatpush1.bf16.msra.mxu0 %v353
    %370 = vmatprep.subr.bf16.mxu0 0
    %371 = vmatpush1.bf16.msra.mxu0 %v352
    %372 = vmatprep.subr.bf16.mxu0 0
    %373 = vmatpush1.bf16.msra.mxu0 %v351
    %374 = vmatprep.subr.bf16.mxu0 0
    %375 = vmatpush1.bf16.msra.mxu0 %v350
    %376 = vmatprep.subr.bf16.mxu0 0
    %377 = vmatpush1.bf16.msra.mxu0 %v349
    %378 = vmatprep.subr.bf16.mxu0 0
    %379 = vmatpush1.bf16.msra.mxu0 %v348
    %380 = vmatprep.subr.bf16.mxu0 0
    %381 = vmatpush2.bf16.msra.mxu0 0
    %382 = vmatprep.subr.bf16.mxu0 0
    %383 = vmatpush2.bf16.msra.mxu0 0
    %384 = vmatprep.subr.bf16.mxu0 0
    %385 = vmatpush2.bf16.msra.mxu0 0
    %386 = vmatprep.subr.bf16.mxu0 0
    %387 = vmatpush2.bf16.msra.mxu0 0
    %388 = vmatprep.subr.bf16.mxu0 0
    %389 = vmatpush2.bf16.msra.mxu0 0
    %390 = vmatprep.subr.bf16.mxu0 0
    %391 = vmatpush2.bf16.msra.mxu0 0
    %392 = vmatprep.subr.bf16.mxu0 0
    %393 = vmatpush2.bf16.msra.mxu0 0
    %394 = vmatprep.subr.bf16.mxu0 0
    %395 = vmatpush2.bf16.msra.mxu0 0
    %396 = vmatprep.mubr.bf16.mxu0 0
    %397 = vmatmul.mubr.bf16.gmra.mxu0 %v285
    %v398 = vpop.f32.mrf.mxu0
    %v399 = vadd.f32 %v314, %v398
    %v400 = vpop.f32.mrf.mxu0
    %v401 = vpop.f32.mrf.mxu0
    %v402 = vadd.f32 %v314, %v401
    %v403 = vpop.f32.mrf.mxu0
    %404 = vmatprep.mubr.bf16.mxu0 0
    %405 = vmatmul.mubr.bf16.gmra.mxu0 %v286
    %v406 = vpop.f32.mrf.mxu0
    %v407 = vadd.f32 %v314, %v406
    %v408 = vpop.f32.mrf.mxu0
    %v409 = vpop.f32.mrf.mxu0
    %v410 = vadd.f32 %v314, %v409
    %v411 = vpop.f32.mrf.mxu0
    %412 = vmatprep.mubr.bf16.mxu0 0
    %413 = vmatmul.mubr.bf16.gmra.mxu0 %v287
    %v414 = vpop.f32.mrf.mxu0
    %v415 = vadd.f32 %v314, %v414
    %v416 = vpop.f32.mrf.mxu0
    %v417 = vpop.f32.mrf.mxu0
    %v418 = vadd.f32 %v314, %v417
    %v419 = vpop.f32.mrf.mxu0
    %420 = vmatprep.mubr.bf16.mxu0 0
    %421 = vmatmul.mubr.bf16.gmra.mxu0 %v288
    %v422 = vpop.f32.mrf.mxu0
    %v423 = vadd.f32 %v314, %v422
    %v424 = vpop.f32.mrf.mxu0
    %v425 = vpop.f32.mrf.mxu0
    %v426 = vadd.f32 %v314, %v425
    %v427 = vpop.f32.mrf.mxu0
    %428 = vmatprep.mubr.bf16.mxu0 0
    %429 = vmatmul.mubr.bf16.gmra.mxu0 %v289
    %v430 = vpop.f32.mrf.mxu0
    %v431 = vadd.f32 %v314, %v430
    %v432 = vpop.f32.mrf.mxu0
    %v433 = vpop.f32.mrf.mxu0
    %v434 = vadd.f32 %v314, %v433
    %v435 = vpop.f32.mrf.mxu0
    %436 = vmatprep.mubr.bf16.mxu0 0
    %437 = vmatmul.mubr.bf16.gmra.mxu0 %v290
    %v438 = vpop.f32.mrf.mxu0
    %v439 = vadd.f32 %v314, %v438
    %v440 = vpop.f32.mrf.mxu0
    %v441 = vpop.f32.mrf.mxu0
    %v442 = vadd.f32 %v314, %v441
    %v443 = vpop.f32.mrf.mxu0
    %444 = vmatprep.mubr.bf16.mxu0 0
    %445 = vmatmul.mubr.bf16.gmra.mxu0 %v291
    %v446 = vpop.f32.mrf.mxu0
    %v447 = vadd.f32 %v314, %v446
    %v448 = vpop.f32.mrf.mxu0
    %v449 = vpop.f32.mrf.mxu0
    %v450 = vadd.f32 %v314, %v449
    %v451 = vpop.f32.mrf.mxu0
    %452 = vmatprep.mubr.bf16.mxu0 0
    %453 = vmatmul.mubr.bf16.gmra.mxu0 %v292
    %v454 = vpop.f32.mrf.mxu0
    %v455 = vadd.f32 %v314, %v454
    %v456 = vpop.f32.mrf.mxu0
    %v457 = vpop.f32.mrf.mxu0
    %v458 = vadd.f32 %v314, %v457
    %v459 = vpop.f32.mrf.mxu0
    %460 = vdwg.mxu0
    %v461 = vmax.f32 %v399, 0.0
    %v462 = vmax.f32 %v402, 0.0
    %v463 = vmax.f32 %v407, 0.0
    %v464 = vmax.f32 %v410, 0.0
    %v465 = vmax.f32 %v415, 0.0
    %v466 = vmax.f32 %v418, 0.0
    %v467 = vmax.f32 %v423, 0.0
    %v468 = vmax.f32 %v426, 0.0
    %v469 = vmax.f32 %v431, 0.0
    %v470 = vmax.f32 %v434, 0.0
    %v471 = vmax.f32 %v439, 0.0
    %v472 = vmax.f32 %v442, 0.0
    %v473 = vmax.f32 %v447, 0.0
    %v474 = vmax.f32 %v450, 0.0
    %v475 = vmax.f32 %v455, 0.0
    %v476 = vmax.f32 %v458, 0.0
    %v477 = vpack.c.bf16 %v462, %v461
    %v478 = vpack.c.bf16 %v464, %v463
    %v479 = vpack.c.bf16 %v466, %v465
    %v480 = vpack.c.bf16 %v468, %v467
    %v481 = vpack.c.bf16 %v470, %v469
    %v482 = vpack.c.bf16 %v472, %v471
    %v483 = vpack.c.bf16 %v474, %v473
    %v484 = vpack.c.bf16 %v476, %v475
    %485 = vmatprep.subr.bf16.mxu0 0
    %486 = vmatpush1.bf16.msra.mxu0 %v484
    %487 = vmatprep.subr.bf16.mxu0 0
    %488 = vmatpush1.bf16.msra.mxu0 %v483
    %489 = vmatprep.subr.bf16.mxu0 0
    %490 = vmatpush1.bf16.msra.mxu0 %v482
    %491 = vmatprep.subr.bf16.mxu0 0
    %492 = vmatpush1.bf16.msra.mxu0 %v481
    %493 = vmatprep.subr.bf16.mxu0 0
    %494 = vmatpush1.bf16.msra.mxu0 %v480
    %495 = vmatprep.subr.bf16.mxu0 0
    %496 = vmatpush1.bf16.msra.mxu0 %v479
    %497 = vmatprep.subr.bf16.mxu0 0
    %498 = vmatpush1.bf16.msra.mxu0 %v478
    %499 = vmatprep.subr.bf16.mxu0 0
    %500 = vmatpush1.bf16.msra.mxu0 %v477
    %501 = vmatprep.subr.bf16.mxu0 0
    %502 = vmatpush2.bf16.msra.mxu0 0
    %503 = vmatprep.subr.bf16.mxu0 0
    %504 = vmatpush2.bf16.msra.mxu0 0
    %505 = vmatprep.subr.bf16.mxu0 0
    %506 = vmatpush2.bf16.msra.mxu0 0
    %507 = vmatprep.subr.bf16.mxu0 0
    %508 = vmatpush2.bf16.msra.mxu0 0
    %509 = vmatprep.subr.bf16.mxu0 0
    %510 = vmatpush2.bf16.msra.mxu0 0
    %511 = vmatprep.subr.bf16.mxu0 0
    %512 = vmatpush2.bf16.msra.mxu0 0
    %513 = vmatprep.subr.bf16.mxu0 0
    %514 = vmatpush2.bf16.msra.mxu0 0
    %515 = vmatprep.subr.bf16.mxu0 0
    %516 = vmatpush2.bf16.msra.mxu0 0
    %517 = vmatprep.mubr.bf16.mxu0 0
    %518 = vmatmul.mubr.bf16.gmra.mxu0 %v124
    %v519 = vpop.f32.mrf.mxu0
    %v520 = vadd.f32 0.0, %v519
    %v521 = vpop.f32.mrf.mxu0
    %v522 = vpop.f32.mrf.mxu0
    %v523 = vadd.f32 0.0, %v522
    %v524 = vpop.f32.mrf.mxu0
    %525 = vmatprep.mubr.bf16.mxu0 0
    %526 = vmatmul.mubr.bf16.gmra.mxu0 %v125
    %v527 = vpop.f32.mrf.mxu0
    %v528 = vadd.f32 0.0, %v527
    %v529 = vpop.f32.mrf.mxu0
    %v530 = vpop.f32.mrf.mxu0
    %v531 = vadd.f32 0.0, %v530
    %v532 = vpop.f32.mrf.mxu0
    %533 = vmatprep.mubr.bf16.mxu0 0
    %534 = vmatmul.mubr.bf16.gmra.mxu0 %v126
    %v535 = vpop.f32.mrf.mxu0
    %v536 = vadd.f32 0.0, %v535
    %v537 = vpop.f32.mrf.mxu0
    %v538 = vpop.f32.mrf.mxu0
    %v539 = vadd.f32 0.0, %v538
    %v540 = vpop.f32.mrf.mxu0
    %541 = vmatprep.mubr.bf16.mxu0 0
    %542 = vmatmul.mubr.bf16.gmra.mxu0 %v127
    %v543 = vpop.f32.mrf.mxu0
    %v544 = vadd.f32 0.0, %v543
    %v545 = vpop.f32.mrf.mxu0
    %v546 = vpop.f32.mrf.mxu0
    %v547 = vadd.f32 0.0, %v546
    %v548 = vpop.f32.mrf.mxu0
    %549 = vmatprep.mubr.bf16.mxu0 0
    %550 = vmatmul.mubr.bf16.gmra.mxu0 %v128
    %v551 = vpop.f32.mrf.mxu0
    %v552 = vadd.f32 0.0, %v551
    %v553 = vpop.f32.mrf.mxu0
    %v554 = vpop.f32.mrf.mxu0
    %v555 = vadd.f32 0.0, %v554
    %v556 = vpop.f32.mrf.mxu0
    %557 = vmatprep.mubr.bf16.mxu0 0
    %558 = vmatmul.mubr.bf16.gmra.mxu0 %v129
    %v559 = vpop.f32.mrf.mxu0
    %v560 = vadd.f32 0.0, %v559
    %v561 = vpop.f32.mrf.mxu0
    %v562 = vpop.f32.mrf.mxu0
    %v563 = vadd.f32 0.0, %v562
    %v564 = vpop.f32.mrf.mxu0
    %565 = vmatprep.mubr.bf16.mxu0 0
    %566 = vmatmul.mubr.bf16.gmra.mxu0 %v130
    %v567 = vpop.f32.mrf.mxu0
    %v568 = vadd.f32 0.0, %v567
    %v569 = vpop.f32.mrf.mxu0
    %v570 = vpop.f32.mrf.mxu0
    %v571 = vadd.f32 0.0, %v570
    %v572 = vpop.f32.mrf.mxu0
    %573 = vmatprep.mubr.bf16.mxu0 0
    %574 = vmatmul.mubr.bf16.gmra.mxu0 %v131
    %v575 = vpop.f32.mrf.mxu0
    %v576 = vadd.f32 0.0, %v575
    %v577 = vpop.f32.mrf.mxu0
    %v578 = vpop.f32.mrf.mxu0
    %v579 = vadd.f32 0.0, %v578
    %v580 = vpop.f32.mrf.mxu0
    %581 = vdwg.mxu0
    %v582 = vpack.c.bf16 %v523, %v520
    %v583 = vpack.c.bf16 %v531, %v528
    %v584 = vpack.c.bf16 %v539, %v536
    %v585 = vpack.c.bf16 %v547, %v544
    %v586 = vpack.c.bf16 %v555, %v552
    %v587 = vpack.c.bf16 %v563, %v560
    %v588 = vpack.c.bf16 %v571, %v568
    %v589 = vpack.c.bf16 %v579, %v576
    %s590 = scalar_lea.vmem [#allocation7], 64
    %v591 = vld [vmem:[%s590] sm:$0xf]
    %v592 = vld [vmem:[%s590 + $0x4] sm:$0xf]
    %v593 = vld [vmem:[%s590 + $0x8] sm:$0xf]
    %v594 = vld [vmem:[%s590 + $0xc] sm:$0xf]
    %v595 = vld [vmem:[%s590 + $0x10] sm:$0xf]
    %v596 = vld [vmem:[%s590 + $0x14] sm:$0xf]
    %v597 = vld [vmem:[%s590 + $0x18] sm:$0xf]
    %v598 = vld [vmem:[%s590 + $0x1c] sm:$0xf]
    %v599 = vld [vmem:[%s590 + $0x20] sm:$0xf]
    %v600 = vld [vmem:[%s590 + $0x24] sm:$0xf]
    %v601 = vld [vmem:[%s590 + $0x28] sm:$0xf]
    %v602 = vld [vmem:[%s590 + $0x2c] sm:$0xf]
    %v603 = vld [vmem:[%s590 + $0x30] sm:$0xf]
    %v604 = vld [vmem:[%s590 + $0x34] sm:$0xf]
    %v605 = vld [vmem:[%s590 + $0x38] sm:$0xf]
    %v606 = vld [vmem:[%s590 + $0x3c] sm:$0xf]
    %s607 = scalar_lea.vmem %s3, 1
    %v608 = vld [vmem:[%s607] sm:$0x1]
    %v610 = vlaneseq
    %v611 = vshrl.u32 %v610, 7
    %v612 = vsub.s32 0, %v611
    %v613 = vrot.slane %v608, %v612
    %v631 = vunpack.c.l.b16 %v591
    %v632 = vunpack.c.l.b16 %v592
    %v633 = vunpack.c.l.b16 %v593
    %v634 = vunpack.c.l.b16 %v594
    %v635 = vunpack.c.l.b16 %v595
    %v636 = vunpack.c.l.b16 %v596
    %v637 = vunpack.c.l.b16 %v597
    %v638 = vunpack.c.l.b16 %v598
    %v639 = vunpack.c.l.b16 %v599
    %v640 = vunpack.c.l.b16 %v600
    %v641 = vunpack.c.l.b16 %v601
    %v642 = vunpack.c.l.b16 %v602
    %v643 = vunpack.c.l.b16 %v603
    %v644 = vunpack.c.l.b16 %v604
    %v645 = vunpack.c.l.b16 %v605
    %v646 = vunpack.c.l.b16 %v606
    %v647 = vpack.c.b16 %v632, %v631
    %v648 = vpack.c.b16 %v634, %v633
    %v649 = vpack.c.b16 %v636, %v635
    %v650 = vpack.c.b16 %v638, %v637
    %v651 = vpack.c.b16 %v640, %v639
    %v652 = vpack.c.b16 %v642, %v641
    %v653 = vpack.c.b16 %v644, %v643
    %v654 = vpack.c.b16 %v646, %v645
    %663 = vmatprep.subr.bf16.mxu0 0
    %664 = vmatpush1.bf16.msra.mxu0 %v654
    %665 = vmatprep.subr.bf16.mxu0 0
    %666 = vmatpush1.bf16.msra.mxu0 %v653
    %667 = vmatprep.subr.bf16.mxu0 0
    %668 = vmatpush1.bf16.msra.mxu0 %v652
    %669 = vmatprep.subr.bf16.mxu0 0
    %670 = vmatpush1.bf16.msra.mxu0 %v651
    %671 = vmatprep.subr.bf16.mxu0 0
    %672 = vmatpush1.bf16.msra.mxu0 %v650
    %673 = vmatprep.subr.bf16.mxu0 0
    %674 = vmatpush1.bf16.msra.mxu0 %v649
    %675 = vmatprep.subr.bf16.mxu0 0
    %676 = vmatpush1.bf16.msra.mxu0 %v648
    %677 = vmatprep.subr.bf16.mxu0 0
    %678 = vmatpush1.bf16.msra.mxu0 %v647
    %679 = vmatprep.subr.bf16.mxu0 0
    %680 = vmatpush2.bf16.msra.mxu0 0
    %681 = vmatprep.subr.bf16.mxu0 0
    %682 = vmatpush2.bf16.msra.mxu0 0
    %683 = vmatprep.subr.bf16.mxu0 0
    %684 = vmatpush2.bf16.msra.mxu0 0
    %685 = vmatprep.subr.bf16.mxu0 0
    %686 = vmatpush2.bf16.msra.mxu0 0
    %687 = vmatprep.subr.bf16.mxu0 0
    %688 = vmatpush2.bf16.msra.mxu0 0
    %689 = vmatprep.subr.bf16.mxu0 0
    %690 = vmatpush2.bf16.msra.mxu0 0
    %691 = vmatprep.subr.bf16.mxu0 0
    %692 = vmatpush2.bf16.msra.mxu0 0
    %693 = vmatprep.subr.bf16.mxu0 0
    %694 = vmatpush2.bf16.msra.mxu0 0
    %695 = vmatprep.mubr.bf16.mxu0 0
    %696 = vmatmul.mubr.bf16.gmra.mxu0 %v582
    %v697 = vpop.f32.mrf.mxu0
    %v698 = vadd.f32 %v613, %v697
    %v699 = vpop.f32.mrf.mxu0
    %v700 = vpop.f32.mrf.mxu0
    %v701 = vadd.f32 %v613, %v700
    %v702 = vpop.f32.mrf.mxu0
    %703 = vmatprep.mubr.bf16.mxu0 0
    %704 = vmatmul.mubr.bf16.gmra.mxu0 %v583
    %v705 = vpop.f32.mrf.mxu0
    %v706 = vadd.f32 %v613, %v705
    %v707 = vpop.f32.mrf.mxu0
    %v708 = vpop.f32.mrf.mxu0
    %v709 = vadd.f32 %v613, %v708
    %v710 = vpop.f32.mrf.mxu0
    %711 = vmatprep.mubr.bf16.mxu0 0
    %712 = vmatmul.mubr.bf16.gmra.mxu0 %v584
    %v713 = vpop.f32.mrf.mxu0
    %v714 = vadd.f32 %v613, %v713
    %v715 = vpop.f32.mrf.mxu0
    %v716 = vpop.f32.mrf.mxu0
    %v717 = vadd.f32 %v613, %v716
    %v718 = vpop.f32.mrf.mxu0
    %719 = vmatprep.mubr.bf16.mxu0 0
    %720 = vmatmul.mubr.bf16.gmra.mxu0 %v585
    %v721 = vpop.f32.mrf.mxu0
    %v722 = vadd.f32 %v613, %v721
    %v723 = vpop.f32.mrf.mxu0
    %v724 = vpop.f32.mrf.mxu0
    %v725 = vadd.f32 %v613, %v724
    %v726 = vpop.f32.mrf.mxu0
    %727 = vmatprep.mubr.bf16.mxu0 0
    %728 = vmatmul.mubr.bf16.gmra.mxu0 %v586
    %v729 = vpop.f32.mrf.mxu0
    %v730 = vadd.f32 %v613, %v729
    %v731 = vpop.f32.mrf.mxu0
    %v732 = vpop.f32.mrf.mxu0
    %v733 = vadd.f32 %v613, %v732
    %v734 = vpop.f32.mrf.mxu0
    %735 = vmatprep.mubr.bf16.mxu0 0
    %736 = vmatmul.mubr.bf16.gmra.mxu0 %v587
    %v737 = vpop.f32.mrf.mxu0
    %v738 = vadd.f32 %v613, %v737
    %v739 = vpop.f32.mrf.mxu0
    %v740 = vpop.f32.mrf.mxu0
    %v741 = vadd.f32 %v613, %v740
    %v742 = vpop.f32.mrf.mxu0
    %743 = vmatprep.mubr.bf16.mxu0 0
    %744 = vmatmul.mubr.bf16.gmra.mxu0 %v588
    %v745 = vpop.f32.mrf.mxu0
    %v746 = vadd.f32 %v613, %v745
    %v747 = vpop.f32.mrf.mxu0
    %v748 = vpop.f32.mrf.mxu0
    %v749 = vadd.f32 %v613, %v748
    %v750 = vpop.f32.mrf.mxu0
    %751 = vmatprep.mubr.bf16.mxu0 0
    %752 = vmatmul.mubr.bf16.gmra.mxu0 %v589
    %v753 = vpop.f32.mrf.mxu0
    %v754 = vadd.f32 %v613, %v753
    %v755 = vpop.f32.mrf.mxu0
    %v756 = vpop.f32.mrf.mxu0
    %v757 = vadd.f32 %v613, %v756
    %v758 = vpop.f32.mrf.mxu0
    %759 = vdwg.mxu0
    %v760 = vmax.f32 %v698, 0.0
    %v761 = vmax.f32 %v701, 0.0
    %v762 = vmax.f32 %v706, 0.0
    %v763 = vmax.f32 %v709, 0.0
    %v764 = vmax.f32 %v714, 0.0
    %v765 = vmax.f32 %v717, 0.0
    %v766 = vmax.f32 %v722, 0.0
    %v767 = vmax.f32 %v725, 0.0
    %v768 = vmax.f32 %v730, 0.0
    %v769 = vmax.f32 %v733, 0.0
    %v770 = vmax.f32 %v738, 0.0
    %v771 = vmax.f32 %v741, 0.0
    %v772 = vmax.f32 %v746, 0.0
    %v773 = vmax.f32 %v749, 0.0
    %v774 = vmax.f32 %v754, 0.0
    %v775 = vmax.f32 %v757, 0.0
    %v776 = vpack.c.bf16 %v761, %v760
    %v777 = vpack.c.bf16 %v763, %v762
    %v778 = vpack.c.bf16 %v765, %v764
    %v779 = vpack.c.bf16 %v767, %v766
    %v780 = vpack.c.bf16 %v769, %v768
    %v781 = vpack.c.bf16 %v771, %v770
    %v782 = vpack.c.bf16 %v773, %v772
    %v783 = vpack.c.bf16 %v775, %v774
    %784 = vmatprep.subr.bf16.mxu0 0
    %785 = vmatpush1.bf16.msra.mxu0 %v783
    %786 = vmatprep.subr.bf16.mxu0 0
    %787 = vmatpush1.bf16.msra.mxu0 %v782
    %788 = vmatprep.subr.bf16.mxu0 0
    %789 = vmatpush1.bf16.msra.mxu0 %v781
    %790 = vmatprep.subr.bf16.mxu0 0
    %791 = vmatpush1.bf16.msra.mxu0 %v780
    %792 = vmatprep.subr.bf16.mxu0 0
    %793 = vmatpush1.bf16.msra.mxu0 %v779
    %794 = vmatprep.subr.bf16.mxu0 0
    %795 = vmatpush1.bf16.msra.mxu0 %v778
    %796 = vmatprep.subr.bf16.mxu0 0
    %797 = vmatpush1.bf16.msra.mxu0 %v777
    %798 = vmatprep.subr.bf16.mxu0 0
    %799 = vmatpush1.bf16.msra.mxu0 %v776
    %800 = vmatprep.subr.bf16.mxu0 0
    %801 = vmatpush2.bf16.msra.mxu0 0
    %802 = vmatprep.subr.bf16.mxu0 0
    %803 = vmatpush2.bf16.msra.mxu0 0
    %804 = vmatprep.subr.bf16.mxu0 0
    %805 = vmatpush2.bf16.msra.mxu0 0
    %806 = vmatprep.subr.bf16.mxu0 0
    %807 = vmatpush2.bf16.msra.mxu0 0
    %808 = vmatprep.subr.bf16.mxu0 0
    %809 = vmatpush2.bf16.msra.mxu0 0
    %810 = vmatprep.subr.bf16.mxu0 0
    %811 = vmatpush2.bf16.msra.mxu0 0
    %812 = vmatprep.subr.bf16.mxu0 0
    %813 = vmatpush2.bf16.msra.mxu0 0
    %814 = vmatprep.subr.bf16.mxu0 0
    %815 = vmatpush2.bf16.msra.mxu0 0
    %816 = vmatprep.mubr.bf16.mxu0 0
    %817 = vmatmul.mubr.bf16.gmra.mxu0 %v124
    %v818 = vpop.f32.mrf.mxu0
    %v819 = vadd.f32 0.0, %v818
    %v820 = vpop.f32.mrf.mxu0
    %v821 = vpop.f32.mrf.mxu0
    %v822 = vadd.f32 0.0, %v821
    %v823 = vpop.f32.mrf.mxu0
    %824 = vmatprep.mubr.bf16.mxu0 0
    %825 = vmatmul.mubr.bf16.gmra.mxu0 %v125
    %v826 = vpop.f32.mrf.mxu0
    %v827 = vadd.f32 0.0, %v826
    %v828 = vpop.f32.mrf.mxu0
    %v829 = vpop.f32.mrf.mxu0
    %v830 = vadd.f32 0.0, %v829
    %v831 = vpop.f32.mrf.mxu0
    %832 = vmatprep.mubr.bf16.mxu0 0
    %833 = vmatmul.mubr.bf16.gmra.mxu0 %v126
    %v834 = vpop.f32.mrf.mxu0
    %v835 = vadd.f32 0.0, %v834
    %v836 = vpop.f32.mrf.mxu0
    %v837 = vpop.f32.mrf.mxu0
    %v838 = vadd.f32 0.0, %v837
    %v839 = vpop.f32.mrf.mxu0
    %840 = vmatprep.mubr.bf16.mxu0 0
    %841 = vmatmul.mubr.bf16.gmra.mxu0 %v127
    %v842 = vpop.f32.mrf.mxu0
    %v843 = vadd.f32 0.0, %v842
    %v844 = vpop.f32.mrf.mxu0
    %v845 = vpop.f32.mrf.mxu0
    %v846 = vadd.f32 0.0, %v845
    %v847 = vpop.f32.mrf.mxu0
    %848 = vmatprep.mubr.bf16.mxu0 0
    %849 = vmatmul.mubr.bf16.gmra.mxu0 %v128
    %v850 = vpop.f32.mrf.mxu0
    %v851 = vadd.f32 0.0, %v850
    %v852 = vpop.f32.mrf.mxu0
    %v853 = vpop.f32.mrf.mxu0
    %v854 = vadd.f32 0.0, %v853
    %v855 = vpop.f32.mrf.mxu0
    %856 = vmatprep.mubr.bf16.mxu0 0
    %857 = vmatmul.mubr.bf16.gmra.mxu0 %v129
    %v858 = vpop.f32.mrf.mxu0
    %v859 = vadd.f32 0.0, %v858
    %v860 = vpop.f32.mrf.mxu0
    %v861 = vpop.f32.mrf.mxu0
    %v862 = vadd.f32 0.0, %v861
    %v863 = vpop.f32.mrf.mxu0
    %864 = vmatprep.mubr.bf16.mxu0 0
    %865 = vmatmul.mubr.bf16.gmra.mxu0 %v130
    %v866 = vpop.f32.mrf.mxu0
    %v867 = vadd.f32 0.0, %v866
    %v868 = vpop.f32.mrf.mxu0
    %v869 = vpop.f32.mrf.mxu0
    %v870 = vadd.f32 0.0, %v869
    %v871 = vpop.f32.mrf.mxu0
    %872 = vmatprep.mubr.bf16.mxu0 0
    %873 = vmatmul.mubr.bf16.gmra.mxu0 %v131
    %v874 = vpop.f32.mrf.mxu0
    %v875 = vadd.f32 0.0, %v874
    %v876 = vpop.f32.mrf.mxu0
    %v877 = vpop.f32.mrf.mxu0
    %v878 = vadd.f32 0.0, %v877
    %v879 = vpop.f32.mrf.mxu0
    %880 = vdwg.mxu0
    %v881 = vpack.c.bf16 %v822, %v819
    %v882 = vpack.c.bf16 %v830, %v827
    %v883 = vpack.c.bf16 %v838, %v835
    %v884 = vpack.c.bf16 %v846, %v843
    %v885 = vpack.c.bf16 %v854, %v851
    %v886 = vpack.c.bf16 %v862, %v859
    %v887 = vpack.c.bf16 %v870, %v867
    %v888 = vpack.c.bf16 %v878, %v875
    %s889 = scalar_lea.vmem [#allocation7], 128
    %v890 = vld [vmem:[%s889] sm:$0xf]
    %v891 = vld [vmem:[%s889 + $0x4] sm:$0xf]
    %v892 = vld [vmem:[%s889 + $0x8] sm:$0xf]
    %v893 = vld [vmem:[%s889 + $0xc] sm:$0xf]
    %v894 = vld [vmem:[%s889 + $0x10] sm:$0xf]
    %v895 = vld [vmem:[%s889 + $0x14] sm:$0xf]
    %v896 = vld [vmem:[%s889 + $0x18] sm:$0xf]
    %v897 = vld [vmem:[%s889 + $0x1c] sm:$0xf]
    %v898 = vld [vmem:[%s889 + $0x20] sm:$0xf]
    %v899 = vld [vmem:[%s889 + $0x24] sm:$0xf]
    %v900 = vld [vmem:[%s889 + $0x28] sm:$0xf]
    %v901 = vld [vmem:[%s889 + $0x2c] sm:$0xf]
    %v902 = vld [vmem:[%s889 + $0x30] sm:$0xf]
    %v903 = vld [vmem:[%s889 + $0x34] sm:$0xf]
    %v904 = vld [vmem:[%s889 + $0x38] sm:$0xf]
    %v905 = vld [vmem:[%s889 + $0x3c] sm:$0xf]
    %s906 = scalar_lea.vmem %s3, 2
    %v907 = vld [vmem:[%s906] sm:$0x1]
    %v909 = vlaneseq
    %v910 = vshrl.u32 %v909, 7
    %v911 = vsub.s32 0, %v910
    %v912 = vrot.slane %v907, %v911
    %v930 = vunpack.c.l.b16 %v890
    %v931 = vunpack.c.l.b16 %v891
    %v932 = vunpack.c.l.b16 %v892
    %v933 = vunpack.c.l.b16 %v893
    %v934 = vunpack.c.l.b16 %v894
    %v935 = vunpack.c.l.b16 %v895
    %v936 = vunpack.c.l.b16 %v896
    %v937 = vunpack.c.l.b16 %v897
    %v938 = vunpack.c.l.b16 %v898
    %v939 = vunpack.c.l.b16 %v899
    %v940 = vunpack.c.l.b16 %v900
    %v941 = vunpack.c.l.b16 %v901
    %v942 = vunpack.c.l.b16 %v902
    %v943 = vunpack.c.l.b16 %v903
    %v944 = vunpack.c.l.b16 %v904
    %v945 = vunpack.c.l.b16 %v905
    %v946 = vpack.c.b16 %v931, %v930
    %v947 = vpack.c.b16 %v933, %v932
    %v948 = vpack.c.b16 %v935, %v934
    %v949 = vpack.c.b16 %v937, %v936
    %v950 = vpack.c.b16 %v939, %v938
    %v951 = vpack.c.b16 %v941, %v940
    %v952 = vpack.c.b16 %v943, %v942
    %v953 = vpack.c.b16 %v945, %v944
    %962 = vmatprep.subr.bf16.mxu0 0
    %963 = vmatpush1.bf16.msra.mxu0 %v953
    %964 = vmatprep.subr.bf16.mxu0 0
    %965 = vmatpush1.bf16.msra.mxu0 %v952
    %966 = vmatprep.subr.bf16.mxu0 0
    %967 = vmatpush1.bf16.msra.mxu0 %v951
    %968 = vmatprep.subr.bf16.mxu0 0
    %969 = vmatpush1.bf16.msra.mxu0 %v950
    %970 = vmatprep.subr.bf16.mxu0 0
    %971 = vmatpush1.bf16.msra.mxu0 %v949
    %972 = vmatprep.subr.bf16.mxu0 0
    %973 = vmatpush1.bf16.msra.mxu0 %v948
    %974 = vmatprep.subr.bf16.mxu0 0
    %975 = vmatpush1.bf16.msra.mxu0 %v947
    %976 = vmatprep.subr.bf16.mxu0 0
    %977 = vmatpush1.bf16.msra.mxu0 %v946
    %978 = vmatprep.subr.bf16.mxu0 0
    %979 = vmatpush2.bf16.msra.mxu0 0
    %980 = vmatprep.subr.bf16.mxu0 0
    %981 = vmatpush2.bf16.msra.mxu0 0
    %982 = vmatprep.subr.bf16.mxu0 0
    %983 = vmatpush2.bf16.msra.mxu0 0
    %984 = vmatprep.subr.bf16.mxu0 0
    %985 = vmatpush2.bf16.msra.mxu0 0
    %986 = vmatprep.subr.bf16.mxu0 0
    %987 = vmatpush2.bf16.msra.mxu0 0
    %988 = vmatprep.subr.bf16.mxu0 0
    %989 = vmatpush2.bf16.msra.mxu0 0
    %990 = vmatprep.subr.bf16.mxu0 0
    %991 = vmatpush2.bf16.msra.mxu0 0
    %992 = vmatprep.subr.bf16.mxu0 0
    %993 = vmatpush2.bf16.msra.mxu0 0
    %994 = vmatprep.mubr.bf16.mxu0 0
    %995 = vmatmul.mubr.bf16.gmra.mxu0 %v881
    %v996 = vpop.f32.mrf.mxu0
    %v997 = vadd.f32 %v912, %v996
    %v998 = vpop.f32.mrf.mxu0
    %v999 = vpop.f32.mrf.mxu0
    %v1000 = vadd.f32 %v912, %v999
    %v1001 = vpop.f32.mrf.mxu0
    %1002 = vmatprep.mubr.bf16.mxu0 0
    %1003 = vmatmul.mubr.bf16.gmra.mxu0 %v882
    %v1004 = vpop.f32.mrf.mxu0
    %v1005 = vadd.f32 %v912, %v1004
    %v1006 = vpop.f32.mrf.mxu0
    %v1007 = vpop.f32.mrf.mxu0
    %v1008 = vadd.f32 %v912, %v1007
    %v1009 = vpop.f32.mrf.mxu0
    %1010 = vmatprep.mubr.bf16.mxu0 0
    %1011 = vmatmul.mubr.bf16.gmra.mxu0 %v883
    %v1012 = vpop.f32.mrf.mxu0
    %v1013 = vadd.f32 %v912, %v1012
    %v1014 = vpop.f32.mrf.mxu0
    %v1015 = vpop.f32.mrf.mxu0
    %v1016 = vadd.f32 %v912, %v1015
    %v1017 = vpop.f32.mrf.mxu0
    %1018 = vmatprep.mubr.bf16.mxu0 0
    %1019 = vmatmul.mubr.bf16.gmra.mxu0 %v884
    %v1020 = vpop.f32.mrf.mxu0
    %v1021 = vadd.f32 %v912, %v1020
    %v1022 = vpop.f32.mrf.mxu0
    %v1023 = vpop.f32.mrf.mxu0
    %v1024 = vadd.f32 %v912, %v1023
    %v1025 = vpop.f32.mrf.mxu0
    %1026 = vmatprep.mubr.bf16.mxu0 0
    %1027 = vmatmul.mubr.bf16.gmra.mxu0 %v885
    %v1028 = vpop.f32.mrf.mxu0
    %v1029 = vadd.f32 %v912, %v1028
    %v1030 = vpop.f32.mrf.mxu0
    %v1031 = vpop.f32.mrf.mxu0
    %v1032 = vadd.f32 %v912, %v1031
    %v1033 = vpop.f32.mrf.mxu0
    %1034 = vmatprep.mubr.bf16.mxu0 0
    %1035 = vmatmul.mubr.bf16.gmra.mxu0 %v886
    %v1036 = vpop.f32.mrf.mxu0
    %v1037 = vadd.f32 %v912, %v1036
    %v1038 = vpop.f32.mrf.mxu0
    %v1039 = vpop.f32.mrf.mxu0
    %v1040 = vadd.f32 %v912, %v1039
    %v1041 = vpop.f32.mrf.mxu0
    %1042 = vmatprep.mubr.bf16.mxu0 0
    %1043 = vmatmul.mubr.bf16.gmra.mxu0 %v887
    %v1044 = vpop.f32.mrf.mxu0
    %v1045 = vadd.f32 %v912, %v1044
    %v1046 = vpop.f32.mrf.mxu0
    %v1047 = vpop.f32.mrf.mxu0
    %v1048 = vadd.f32 %v912, %v1047
    %v1049 = vpop.f32.mrf.mxu0
    %1050 = vmatprep.mubr.bf16.mxu0 0
    %1051 = vmatmul.mubr.bf16.gmra.mxu0 %v888
    %v1052 = vpop.f32.mrf.mxu0
    %v1053 = vadd.f32 %v912, %v1052
    %v1054 = vpop.f32.mrf.mxu0
    %v1055 = vpop.f32.mrf.mxu0
    %v1056 = vadd.f32 %v912, %v1055
    %v1057 = vpop.f32.mrf.mxu0
    %1058 = vdwg.mxu0
    %1059 = vst [vmem:[#allocation8] sm:$0xff] %v997
    %1060 = vst [vmem:[#allocation8 + $0x8] sm:$0xff] %v1000
    %1061 = vst [vmem:[#allocation8 + $0x10] sm:$0xff] %v1005
    %1062 = vst [vmem:[#allocation8 + $0x18] sm:$0xff] %v1008
    %1063 = vst [vmem:[#allocation8 + $0x20] sm:$0xff] %v1013
    %1064 = vst [vmem:[#allocation8 + $0x28] sm:$0xff] %v1016
    %1065 = vst [vmem:[#allocation8 + $0x30] sm:$0xff] %v1021
    %1066 = vst [vmem:[#allocation8 + $0x38] sm:$0xff] %v1024
    %1067 = vst [vmem:[#allocation8 + $0x40] sm:$0xff] %v1029
    %1068 = vst [vmem:[#allocation8 + $0x48] sm:$0xff] %v1032
    %1069 = vst [vmem:[#allocation8 + $0x50] sm:$0xff] %v1037
    %1070 = vst [vmem:[#allocation8 + $0x58] sm:$0xff] %v1040
    %1071 = vst [vmem:[#allocation8 + $0x60] sm:$0xff] %v1045
    %1072 = vst [vmem:[#allocation8 + $0x68] sm:$0xff] %v1048
    %1073 = vst [vmem:[#allocation8 + $0x70] sm:$0xff] %v1053
    %1074 = vst [vmem:[#allocation8 + $0x78] sm:$0xff] %v1056
    // Predicated region
    $region30: #{tpu_custom_call.1} parent=1 // pred_check
      _
    $region31: #{tpu_custom_call.1} parent=1 // pred_check_branch
      %1076 = sbr.rel (0) target = $region33
    $region32: #{tpu_custom_call.1} parent=1 // pred_region
      %s1078 = ssub.s32 2048, 2048
      %1079 = vsyncadd [#allocation4], %s1078
      %s1080 = sshll.u32 [#allocation8], 4
      %s1081 = int_to_ptr.vmem [resolvable:$true] %s1080
      %1086 = dma.vmem_to_hbm [thread:$0]  %s1081, 2048, %s4, [#allocation4], 128, 128, 8
    $region33: #{tpu_custom_call.1} parent=1 // pred_fallthru
      _
    // Predicated region
    $region34: #{tpu_custom_call.1} parent=1 // pred_check
      _
    $region35: #{tpu_custom_call.1} parent=1 // pred_check_branch
      %1088 = sbr.rel (0) target = $region37
    $region36: #{tpu_custom_call.1} parent=1 // pred_region
      %1089 = dma.done [#allocation4], 2048
    $region37: #{tpu_custom_call.1} parent=1 // pred_fallthru
      _
    %1090 = vsyncpa [#allocation3], 1
    %1091 = vsyncpa [#allocation6], 1
    %1092 = vsyncpa [#allocation4], 1

</llo_original>
